<compile_context>
chip_gen: v5e
topology: v5e:2x2
jax: 0.10.0
libtpu: 0.0.40
codegen_flags: <defaults>
</compile_context>

<pallas_src>
import jax
import jax.numpy as jnp
from jax.experimental import pallas as pl
from jax.experimental.pallas import tpu as pltpu

IN_FEATURES = 4
HIDDEN = 128
N_ACTIONS = 2
HEAD_LANES = 8            # fused head output: [p-logit0, p-logit1, value, 5x pad]


def _round_up(n, m):
    return ((n + m - 1) // m) * m


def _policy_kernel(x_ref, w1_ref, b1_ref, w23_ref, b23_ref, probs_ref, value_ref):
    x = x_ref[...]                                                  # (Bb, 4) f32

    # hidden layer: relu(x @ W1 + b1) -> (Bb, 128)
    h = jnp.dot(x, w1_ref[...], preferred_element_type=jnp.float32) + b1_ref[...]
    h = jnp.maximum(h, 0.0)

    # fused heads: one narrow MXU pass -> (Bb, 8)
    #   lane 0,1 = action logits, lane 2 = state value, lanes 3..7 = 0 (pad)
    fused = jnp.dot(h, w23_ref[...], preferred_element_type=jnp.float32) + b23_ref[...]

    # closed-form, numerically stable 2-class softmax (VPU/EUP only, no XLU):
    #   d = l0 - l1 ; z = exp(-|d|) ; p_big = 1/(1+z) ; p_small = z/(1+z)
    #   p0 = p_big if d >= 0 else p_small ; p1 = 1 - p0  (sums to 1 exactly)
    l0 = fused[:, 0:1]
    l1 = fused[:, 1:2]
    d = l0 - l1
    z = jnp.exp(-jnp.abs(d))
    inv = pl.reciprocal(1.0 + z, approx=True)
    p0 = jnp.where(d >= 0.0, inv, z * inv)
    p1 = 1.0 - p0

    probs_ref[...] = jnp.concatenate([p0, p1], axis=1).astype(probs_ref.dtype)
    value_ref[...] = fused[:, N_ACTIONS:N_ACTIONS + 1].astype(value_ref.dtype)


def _fuse_head_params(params):
    """Pack (w2, b2, w3, b3) into one narrow (128, 8)/(1, 8) fused head."""
    w1, b1, w2, b2, w3, b3 = params
    pad = HEAD_LANES - (N_ACTIONS + 1)
    w23 = jnp.concatenate(
        [w2, w3, jnp.zeros((HIDDEN, pad), jnp.float32)], axis=1)    # (128, 8)
    b23 = jnp.concatenate(
        [b2, b3, jnp.zeros((1, pad), jnp.float32)], axis=1)         # (1, 8)
    return w1, b1, w23, b23


def policy_forward(x, params, *, block_b=2048):
    """x: (B, 4) float32.  Returns (action_prob (B, 2), state_values (B, 1))."""
    B = x.shape[0]
    w1, b1, w23, b23 = _fuse_head_params(params)

    # Batch tiling: multiple of 8 sublanes, balanced so padding stays < 8 rows
    # per tile, and at least 2 grid steps when the batch allows it so v7x's
    # "parallel" axis actually shards across both TensorCores.
    n_tiles = pl.cdiv(B, block_b)
    if B >= 16:
        n_tiles = max(n_tiles, 2)
    b_blk = _round_up(pl.cdiv(B, n_tiles), 8)
    Bp = _round_up(B, b_blk)
    if Bp != B:
        x = jnp.pad(x, ((0, Bp - B), (0, 0)))
    grid = (Bp // b_blk,)

    # honest cost hint: two small matmuls + one exp per row; HBM bytes are
    # dominated by the x read and the narrow head writeback.
    flops = 2 * Bp * (IN_FEATURES * HIDDEN + HIDDEN * HEAD_LANES)
    bytes_accessed = (
        Bp * IN_FEATURES * 4                      # x read
        + Bp * (N_ACTIONS + 1) * 4                # probs + value writeback
        + IN_FEATURES * HIDDEN * 4 + HIDDEN * 4   # W1, b1
        + HIDDEN * HEAD_LANES * 4 + HEAD_LANES * 4)

    probs, values = pl.pallas_call(
        _policy_kernel,
        grid=grid,
        in_specs=[
            pl.BlockSpec((b_blk, IN_FEATURES), lambda i: (i, 0)),   # x (tiled)
            pl.BlockSpec((IN_FEATURES, HIDDEN), lambda i: (0, 0)),  # W1 (resident)
            pl.BlockSpec((1, HIDDEN), lambda i: (0, 0)),            # b1
            pl.BlockSpec((HIDDEN, HEAD_LANES), lambda i: (0, 0)),   # fused W23
            pl.BlockSpec((1, HEAD_LANES), lambda i: (0, 0)),        # fused b23
        ],
        out_specs=(
            pl.BlockSpec((b_blk, N_ACTIONS), lambda i: (i, 0)),     # action probs
            pl.BlockSpec((b_blk, 1), lambda i: (i, 0)),             # state value
        ),
        out_shape=(
            jax.ShapeDtypeStruct((Bp, N_ACTIONS), jnp.float32),
            jax.ShapeDtypeStruct((Bp, 1), jnp.float32),
        ),
        compiler_params=pltpu.CompilerParams(
            dimension_semantics=("parallel",),
            vmem_limit_bytes=32 * 1024 * 1024),
        cost_estimate=pl.CostEstimate(
            flops=flops, transcendentals=Bp, bytes_accessed=bytes_accessed),
    )(x, w1, b1, w23, b23)

    if Bp != B:
        probs = probs[:B]
        values = values[:B]
    return probs, values


def init_params(key):
    """Deterministic init mirroring nn.Linear shapes (weights stored transposed)."""
    k1, k2, k3, k4, k5, k6 = jax.random.split(key, 6)

    def uniform(k, shape, fan_in):
        bound = 1.0 / jnp.sqrt(float(fan_in))
        return jax.random.uniform(k, shape, jnp.float32, -bound, bound)

    w1 = uniform(k1, (IN_FEATURES, HIDDEN), IN_FEATURES)   # affine1.weight.T
    b1 = uniform(k2, (1, HIDDEN), IN_FEATURES)             # affine1.bias
    w2 = uniform(k3, (HIDDEN, N_ACTIONS), HIDDEN)          # action_head.weight.T
    b2 = uniform(k4, (1, N_ACTIONS), HIDDEN)               # action_head.bias
    w3 = uniform(k5, (HIDDEN, 1), HIDDEN)                  # value_head.weight.T
    b3 = uniform(k6, (1, 1), HIDDEN)                       # value_head.bias
    return (w1, b1, w2, b2, w3, b3)


def reference_forward(x, params):
    """Pure-JAX reference for correctness checking."""
    w1, b1, w2, b2, w3, b3 = params
    h = jnp.maximum(x @ w1 + b1, 0.0)
    logits = h @ w2 + b2
    prob = jax.nn.softmax(logits, axis=-1)
    val = h @ w3 + b3
    return prob, val


if __name__ == "__main__":
    key = jax.random.PRNGKey(0)
    pkey, xkey = jax.random.split(key)

    params = init_params(pkey)
    B = 8
    x = jax.random.normal(xkey, (B, IN_FEATURES), dtype=jnp.float32)  # CartPole state dim = 4

    action_prob, state_values = policy_forward(x, params)
    jax.block_until_ready(action_prob)
    jax.block_until_ready(state_values)

    ref_prob, ref_val = reference_forward(x, params)
    assert action_prob.shape == (B, N_ACTIONS) and state_values.shape == (B, 1)
    # probs use the EUP approximate reciprocal -> slightly relaxed tolerance
    assert jnp.allclose(action_prob, ref_prob, atol=2e-3, rtol=2e-3)
    assert jnp.allclose(state_values, ref_val, atol=1e-4, rtol=1e-4)
    # p1 = 1 - p0 -> rows sum to 1 exactly
    assert jnp.allclose(jnp.sum(action_prob, axis=-1), 1.0, atol=1e-6)

    print("KERNEL_OK")
</pallas_src>

<mosaic_0001>
module attributes {stable_mosaic.version = 11 : i64} {
  func.func @_policy_kernel(%arg0: i32, %arg1: memref<8x4xf32, #tpu.memory_space<vmem>>, %arg2: memref<4x128xf32, #tpu.memory_space<vmem>>, %arg3: memref<1x128xf32, #tpu.memory_space<vmem>>, %arg4: memref<128x8xf32, #tpu.memory_space<vmem>>, %arg5: memref<1x8xf32, #tpu.memory_space<vmem>>, %arg6: memref<8x2xf32, #tpu.memory_space<vmem>>, %arg7: memref<8x1xf32, #tpu.memory_space<vmem>>) attributes {dimension_semantics = [#tpu.dimension_semantics<parallel>], iteration_bounds = array<i64: 1>, scalar_prefetch = 0 : i64, scratch_operands = 0 : i64, tpu.core_type = #tpu.core_type<tc>, window_params = [{transform_indices = @transform_0, window_bounds = array<i64: 8, 4>}, {pipeline_mode = #tpu.pipeline_mode<synchronous>, transform_indices = @transform_1, window_bounds = array<i64: 4, 128>}, {pipeline_mode = #tpu.pipeline_mode<synchronous>, transform_indices = @transform_2, window_bounds = array<i64: 1, 128>}, {pipeline_mode = #tpu.pipeline_mode<synchronous>, transform_indices = @transform_3, window_bounds = array<i64: 128, 8>}, {pipeline_mode = #tpu.pipeline_mode<synchronous>, transform_indices = @transform_4, window_bounds = array<i64: 1, 8>}, {transform_indices = @transform_5, window_bounds = array<i64: 8, 2>}, {transform_indices = @transform_6, window_bounds = array<i64: 8, 1>}]} {
    %c0 = arith.constant 0 : index
    %c0_0 = arith.constant 0 : index
    %0 = vector.load %arg1[%c0, %c0_0] : memref<8x4xf32, #tpu.memory_space<vmem>>, vector<8x4xf32>
    %c0_1 = arith.constant 0 : index
    %c0_2 = arith.constant 0 : index
    %1 = vector.load %arg2[%c0_1, %c0_2] : memref<4x128xf32, #tpu.memory_space<vmem>>, vector<4x128xf32>
    %cst = arith.constant dense<0.000000e+00> : vector<8x128xf32>
    %2 = tpu.matmul %0, %1, %cst {dimension_numbers = #tpu.dot_dimension_numbers<[1], [0], [0], [1], [0, 0, 1, 1], [], []>} : vector<8x4xf32>, vector<4x128xf32>, vector<8x128xf32> -> vector<8x128xf32>
    %c0_3 = arith.constant 0 : index
    %c0_4 = arith.constant 0 : index
    %3 = vector.load %arg3[%c0_3, %c0_4] : memref<1x128xf32, #tpu.memory_space<vmem>>, vector<1x128xf32>
    %4 = vector.broadcast %3 : vector<1x128xf32> to vector<8x128xf32>
    %5 = arith.addf %2, %4 : vector<8x128xf32>
    %cst_5 = arith.constant 0.000000e+00 : f32
    %6 = vector.broadcast %cst_5 : f32 to vector<8x128xf32>
    %7 = arith.maximumf %5, %6 : vector<8x128xf32>
    %c0_6 = arith.constant 0 : index
    %c0_7 = arith.constant 0 : index
    %8 = vector.load %arg4[%c0_6, %c0_7] : memref<128x8xf32, #tpu.memory_space<vmem>>, vector<128x8xf32>
    %cst_8 = arith.constant dense<0.000000e+00> : vector<8x8xf32>
    %9 = tpu.matmul %7, %8, %cst_8 {dimension_numbers = #tpu.dot_dimension_numbers<[1], [0], [0], [1], [0, 0, 1, 1], [], []>} : vector<8x128xf32>, vector<128x8xf32>, vector<8x8xf32> -> vector<8x8xf32>
    %c0_9 = arith.constant 0 : index
    %c0_10 = arith.constant 0 : index
    %10 = vector.load %arg5[%c0_9, %c0_10] : memref<1x8xf32, #tpu.memory_space<vmem>>, vector<1x8xf32>
    %11 = vector.broadcast %10 : vector<1x8xf32> to vector<8x8xf32>
    %12 = arith.addf %9, %11 : vector<8x8xf32>
    %13 = vector.extract_strided_slice %12 {offsets = [0, 0], sizes = [8, 1], strides = [1, 1]} : vector<8x8xf32> to vector<8x1xf32>
    %14 = vector.extract_strided_slice %12 {offsets = [0, 1], sizes = [8, 1], strides = [1, 1]} : vector<8x8xf32> to vector<8x1xf32>
    %15 = arith.subf %13, %14 : vector<8x1xf32>
    %16 = math.absf %15 : vector<8x1xf32>
    %cst_11 = arith.constant 0.000000e+00 : f32
    %17 = vector.broadcast %cst_11 : f32 to vector<8x1xf32>
    %18 = arith.subf %17, %16 : vector<8x1xf32>
    %19 = math.exp %18 : vector<8x1xf32>
    %cst_12 = arith.constant 1.000000e+00 : f32
    %20 = vector.broadcast %cst_12 : f32 to vector<8x1xf32>
    %21 = arith.addf %20, %19 : vector<8x1xf32>
    %22 = tpu.reciprocal %21 {approx = true} : vector<8x1xf32> -> vector<8x1xf32>
    %cst_13 = arith.constant 0.000000e+00 : f32
    %23 = vector.broadcast %cst_13 : f32 to vector<8x1xf32>
    %24 = arith.cmpf oge, %15, %23 : vector<8x1xf32>
    %25 = arith.mulf %19, %22 : vector<8x1xf32>
    %26 = arith.select %24, %22, %25 : vector<8x1xi1>, vector<8x1xf32>
    %cst_14 = arith.constant 1.000000e+00 : f32
    %27 = vector.broadcast %cst_14 : f32 to vector<8x1xf32>
    %28 = arith.subf %27, %26 : vector<8x1xf32>
    %29 = tpu.concatenate %26, %28 in 1 : vector<8x1xf32>, vector<8x1xf32> -> vector<8x2xf32>
    %c0_15 = arith.constant 0 : index
    %c0_16 = arith.constant 0 : index
    %30 = vector.load %arg6[%c0_15, %c0_16] : memref<8x2xf32, #tpu.memory_space<vmem>>, vector<8x2xf32>
    tpu.vector_store %arg6[%c0_15, %c0_16], %29 {strides = array<i32>} : memref<8x2xf32, #tpu.memory_space<vmem>>, vector<8x2xf32>,
    %31 = vector.extract_strided_slice %12 {offsets = [0, 2], sizes = [8, 1], strides = [1, 1]} : vector<8x8xf32> to vector<8x1xf32>
    %c0_17 = arith.constant 0 : index
    %c0_18 = arith.constant 0 : index
    %32 = vector.load %arg7[%c0_17, %c0_18] : memref<8x1xf32, #tpu.memory_space<vmem>>, vector<8x1xf32>
    tpu.vector_store %arg7[%c0_17, %c0_18], %31 {strides = array<i32>} : memref<8x1xf32, #tpu.memory_space<vmem>>, vector<8x1xf32>,
    return
  }
  func.func @transform_0(%arg0: i32) -> (i32, i32) {
    %c0_i32 = arith.constant 0 : i32
    %c0_i32_0 = arith.constant 0 : i32
    return %arg0, %c0_i32 : i32, i32
  }
  func.func @transform_1(%arg0: i32) -> (i32, i32) {
    %c0_i32 = arith.constant 0 : i32
    %c0_i32_0 = arith.constant 0 : i32
    %c0_i32_1 = arith.constant 0 : i32
    return %c0_i32, %c0_i32_0 : i32, i32
  }
  func.func @transform_2(%arg0: i32) -> (i32, i32) {
    %c0_i32 = arith.constant 0 : i32
    %c0_i32_0 = arith.constant 0 : i32
    %c0_i32_1 = arith.constant 0 : i32
    return %c0_i32, %c0_i32_0 : i32, i32
  }
  func.func @transform_3(%arg0: i32) -> (i32, i32) {
    %c0_i32 = arith.constant 0 : i32
    %c0_i32_0 = arith.constant 0 : i32
    %c0_i32_1 = arith.constant 0 : i32
    return %c0_i32, %c0_i32_0 : i32, i32
  }
  func.func @transform_4(%arg0: i32) -> (i32, i32) {
    %c0_i32 = arith.constant 0 : i32
    %c0_i32_0 = arith.constant 0 : i32
    %c0_i32_1 = arith.constant 0 : i32
    return %c0_i32, %c0_i32_0 : i32, i32
  }
  func.func @transform_5(%arg0: i32) -> (i32, i32) {
    %c0_i32 = arith.constant 0 : i32
    %c0_i32_0 = arith.constant 0 : i32
    return %arg0, %c0_i32 : i32, i32
  }
  func.func @transform_6(%arg0: i32) -> (i32, i32) {
    %c0_i32 = arith.constant 0 : i32
    %c0_i32_0 = arith.constant 0 : i32
    return %arg0, %c0_i32 : i32, i32
  }
}

</mosaic_0001>

<llo_original>
// kernel: tpu_custom_call.1
$region0: #{tpu_custom_call.1}
  #allocation0 [shape = 'u32[]', space=smem, size = 0x4, offset = 0x4, fixed_abs, tag = 'smem constant byte address 0x4 - core index']
  #allocation1 [shape = 'u32[72,128]{1,0:T(1,128)}', space=vmem, size = 0x9000, scoped, tag = 'internal scratch']
  %s0 = inlined_call_operand.vmem [shape: f32[8,4], index: 0, kind: input, shape index: {}]
  %s1 = inlined_call_operand.vmem [shape: f32[4,128], index: 1, kind: input, shape index: {}]
  %s2 = inlined_call_operand.vmem [shape: f32[1,128], index: 2, kind: input, shape index: {}]
  %s3 = inlined_call_operand.vmem [shape: f32[128,8], index: 3, kind: input, shape index: {}]
  %s4 = inlined_call_operand.vmem [shape: f32[1,8], index: 4, kind: input, shape index: {}]
  %s5 = inlined_call_operand.vmem [shape: f32[8,2], index: 5, kind: output, shape index: {0}]
  %s6 = inlined_call_operand.vmem [shape: f32[8,1], index: 6, kind: output, shape index: {1}]
  %7 = xla_tuple %s5, %s6
  %s8 = sld [smem:[#allocation0]]
  $region38: #{tpu_custom_call.1} parent=0
    _
  %s10 = ssub.s32 1, %s8
  %s11 = scalar_select 0, %s10, %s8
  // Predicated region
  $region2: #{tpu_custom_call.1} parent=0 // pred_check
    _
  $region3: #{tpu_custom_call.1} parent=0 // pred_check_branch
    %13 = sbr.rel (0) target = $region5
  $region4: #{tpu_custom_call.1} parent=0 // pred_region
    _
  $region5: #{tpu_custom_call.1} parent=0 // pred_fallthru
    _
  // Predicated region
  $region6: #{tpu_custom_call.1} parent=0 // pred_check
    _
  $region7: #{tpu_custom_call.1} parent=0 // pred_check_branch
    %15 = sbr.rel (0) target = $region9
  $region8: #{tpu_custom_call.1} parent=0 // pred_region
    _
  $region9: #{tpu_custom_call.1} parent=0 // pred_fallthru
    _
  // Predicated region
  $region10: #{tpu_custom_call.1} parent=0 // pred_check
    _
  $region11: #{tpu_custom_call.1} parent=0 // pred_check_branch
    %17 = sbr.rel (0) target = $region13
  $region12: #{tpu_custom_call.1} parent=0 // pred_region
    _
  $region13: #{tpu_custom_call.1} parent=0 // pred_fallthru
    _
  // Predicated region
  $region14: #{tpu_custom_call.1} parent=0 // pred_check
    _
  $region15: #{tpu_custom_call.1} parent=0 // pred_check_branch
    %19 = sbr.rel (0) target = $region17
  $region16: #{tpu_custom_call.1} parent=0 // pred_region
    _
  $region17: #{tpu_custom_call.1} parent=0 // pred_fallthru
    _
  // Predicated region
  $region18: #{tpu_custom_call.1} parent=0 // pred_check
    _
  $region19: #{tpu_custom_call.1} parent=0 // pred_check_branch
    %21 = sbr.rel (0) target = $region21
  $region20: #{tpu_custom_call.1} parent=0 // pred_region
    _
  $region21: #{tpu_custom_call.1} parent=0 // pred_fallthru
    _
  %v22 = vld [vmem:[%s0] sm:$0xff]
  %v23 = vld [vmem:[%s1] sm:$0xf]
  %v24 = vld [vmem:[%s2] sm:$0x1]
  %v26 = vperm.slane %v24, 0
  %vm28 = vcmask 31744
  %v30 = vsel %vm28, %v22, 0
  %vm32 = vcmask 1043456
  %v34 = vsel %vm32, %v23, 0
  %36 = vmatpush.msra.mxu0 0.0
  %37 = vmatpush.msra.mxu0 0.0
  %38 = vmatpush.msra.mxu0 0.0
  %39 = vmatpush.msra.mxu0 0.0
  %40 = vmatpush.msra.mxu0 0.0
  %41 = vmatpush.msra.mxu0 0.0
  %42 = vmatpush.msra.mxu0 0.0
  %43 = vmatpush.msra.mxu0 0.0
  %44 = vmatpush.msra.mxu0 0.0
  %45 = vmatpush.msra.mxu0 0.0
  %46 = vmatpush.msra.mxu0 0.0
  %47 = vmatpush.msra.mxu0 0.0
  %48 = vmatpush.msra.mxu0 0.0
  %49 = vmatpush.msra.mxu0 0.0
  %50 = vmatpush.msra.mxu0 0.0
  %51 = vmatpush.msra.mxu0 %v34
  %52 = vmatmul.f32.gmra.mxu0 %v30
  %v53 = vpop.f32.mrf.mxu0
  %v54 = vadd.f32 %v26, %v53
  %55 = vdwg.mxu0
  %v56 = vmax.f32 %v54, 0.0
  %v57 = vld [vmem:[%s3] sm:$0xff]
  %v58 = vld [vmem:[%s3 + $0x8] sm:$0xff]
  %v59 = vld [vmem:[%s3 + $0x10] sm:$0xff]
  %v60 = vld [vmem:[%s3 + $0x18] sm:$0xff]
  %v61 = vld [vmem:[%s3 + $0x20] sm:$0xff]
  %v62 = vld [vmem:[%s3 + $0x28] sm:$0xff]
  %v63 = vld [vmem:[%s3 + $0x30] sm:$0xff]
  %v64 = vld [vmem:[%s3 + $0x38] sm:$0xff]
  %v65 = vld [vmem:[%s3 + $0x40] sm:$0xff]
  %v66 = vld [vmem:[%s3 + $0x48] sm:$0xff]
  %v67 = vld [vmem:[%s3 + $0x50] sm:$0xff]
  %v68 = vld [vmem:[%s3 + $0x58] sm:$0xff]
  %v69 = vld [vmem:[%s3 + $0x60] sm:$0xff]
  %v70 = vld [vmem:[%s3 + $0x68] sm:$0xff]
  %v71 = vld [vmem:[%s3 + $0x70] sm:$0xff]
  %v72 = vld [vmem:[%s3 + $0x78] sm:$0xff]
  %v73 = vld [vmem:[%s4] sm:$0x1]
  %v75 = vperm.slane %v73, 0
  %77 = vmatpush.msra.mxu0 %v72
  %78 = vmatpush.msra.mxu0 %v71
  %79 = vmatpush.msra.mxu0 %v70
  %80 = vmatpush.msra.mxu0 %v69
  %81 = vmatpush.msra.mxu0 %v68
  %82 = vmatpush.msra.mxu0 %v67
  %83 = vmatpush.msra.mxu0 %v66
  %84 = vmatpush.msra.mxu0 %v65
  %85 = vmatpush.msra.mxu0 %v64
  %86 = vmatpush.msra.mxu0 %v63
  %87 = vmatpush.msra.mxu0 %v62
  %88 = vmatpush.msra.mxu0 %v61
  %89 = vmatpush.msra.mxu0 %v60
  %90 = vmatpush.msra.mxu0 %v59
  %91 = vmatpush.msra.mxu0 %v58
  %92 = vmatpush.msra.mxu0 %v57
  %93 = vmatmul.f32.gmra.mxu0 %v56
  %v94 = vpop.f32.mrf.mxu0
  %v95 = vadd.f32 %v75, %v94
  %96 = vdwg.mxu0
  %98 = vrot.lane.b32.xlu0 %v95, 127
  %v99 = vpop.permute.xlu0 %98
  %v101 = vsub.f32 %v95, %v99
  %v102 = vand.u32 2147483647, %v101
  %v103 = vsub.f32 0.0, %v102
  %v104 = vmul.f32 %v103, 1.442695
  %v105 = vpow.pop %v104
  %v106 = vadd.f32 %v105, 1.0
  %v107 = vrcp.pop %v106
  %vm108 = vcmp.ge.f32.partialorder %v101, 0.0
  %v109 = vmul.f32 %v105, %v107
  %v110 = vsel %vm108, %v107, %v109
  %v111 = vsub.f32 1.0, %v110
  %113 = vrot.lane.b32.xlu0 %v111, 1
  %v114 = vpop.permute.xlu0 %113
  %vm116 = vcmask 7168
  %v117 = vsel %vm116, %v110, %v114
  %vm118 = vcmask 15360
  %119 = vst.msk [vmem:[%s5] sm:$0xff] %vm118, %v117
  %120 = vrot.lane.b32.xlu0 %v95, 126
  %v121 = vpop.permute.xlu0 %120
  %123 = vst.msk [vmem:[%s6] sm:$0xff] %vm116, %v121
  // Predicated region
  $region22: #{tpu_custom_call.1} parent=0 // pred_check
    _
  $region23: #{tpu_custom_call.1} parent=0 // pred_check_branch
    %125 = sbr.rel (0) target = $region25
  $region24: #{tpu_custom_call.1} parent=0 // pred_region
    _
  $region25: #{tpu_custom_call.1} parent=0 // pred_fallthru
    _
  // Predicated region
  $region26: #{tpu_custom_call.1} parent=0 // pred_check
    _
  $region27: #{tpu_custom_call.1} parent=0 // pred_check_branch
    %127 = sbr.rel (0) target = $region29
  $region28: #{tpu_custom_call.1} parent=0 // pred_region
    _
  $region29: #{tpu_custom_call.1} parent=0 // pred_fallthru
    _
  // Predicated region
  $region30: #{tpu_custom_call.1} parent=0 // pred_check
    _
  $region31: #{tpu_custom_call.1} parent=0 // pred_check_branch
    %129 = sbr.rel (0) target = $region33
  $region32: #{tpu_custom_call.1} parent=0 // pred_region
    _
  $region33: #{tpu_custom_call.1} parent=0 // pred_fallthru
    _
  // Predicated region
  $region34: #{tpu_custom_call.1} parent=0 // pred_check
    _
  $region35: #{tpu_custom_call.1} parent=0 // pred_check_branch
    %131 = sbr.rel (0) target = $region37
  $region36: #{tpu_custom_call.1} parent=0 // pred_region
    _
  $region37: #{tpu_custom_call.1} parent=0 // pred_fallthru
    _

</llo_original>
